<compile_context>
chip_gen: v6e
topology: v6e:2x2x1
jax: 0.10.0
libtpu: 0.0.40
codegen_flags: <defaults>
</compile_context>

<pallas_src>
import jax
import jax.numpy as jnp
from jax import lax
from jax.experimental import pallas as pl
from jax.experimental.pallas import tpu as pltpu


def _mlp_projector_kernel(x_ref, w1_ref, b1_ref, w2_ref, b2_ref, o_ref):
    """One grid step == one tile of `block_n` token rows.

    x_ref  : (block_n, E)   natural-layout activation rows (streamed)
    w1_ref : (H, E)         fc1.weight, native PyTorch layout (resident)
    b1_ref : (H, 1)         fc1.bias as a column (resident)
    w2_ref : (1, H)         fc2.weight, native PyTorch layout (resident)
    b2_ref : (1,)  SMEM     fc2.bias scalar
    o_ref  : (1, block_n)   lane-dense output row
    """
    x = x_ref[...]                                                  # (Tn, E)

    # fc1 on the MXU, transposed orientation: contract E of both operands
    # (w1 @ x^T) so the result is (H, block_n) with tokens on the lane axis.
    h = lax.dot_general(
        w1_ref[...], x,
        dimension_numbers=(((1,), (1,)), ((), ())),
        preferred_element_type=jnp.float32)                         # (H, Tn)

    # bias + ReLU on the VPU (b1 broadcast across lanes).
    h = jnp.maximum(h + b1_ref[...], 0.0)

    # fc2 on the MXU: (1, H) @ (H, Tn) -> (1, Tn).  M=1 matmul, ~2 pushes,
    # keeps the output lane-dense and frees the VALU slot.
    y = jnp.dot(w2_ref[...], h, preferred_element_type=jnp.float32)  # (1, Tn)

    o_ref[...] = y + b2_ref[0]                                      # SMEM scalar bias


def mlp_projector_forward(x, params, *, block_n=512):
    """x: (..., input_dim) float32 -> (..., 1) float32."""
    orig_shape = x.shape
    E = orig_shape[-1]
    H = params["w1"].shape[0]

    xf = x.reshape(-1, E)                        # (N, E) token rows, no copy of data layout
    N = xf.shape[0]

    num_blocks = pl.cdiv(N, block_n)             # ragged tail handled by the pipeline
    padded_n = num_blocks * block_n              # output padded -> all writes in-bounds

    out = pl.pallas_call(
        _mlp_projector_kernel,
        out_shape=jax.ShapeDtypeStruct((1, padded_n), jnp.float32),
        grid=(num_blocks,),
        in_specs=[
            pl.BlockSpec((block_n, E), lambda i: (i, 0)),       # x row tile (streamed)
            pl.BlockSpec((H, E), lambda i: (0, 0)),             # fc1 weight (resident)
            pl.BlockSpec((H, 1), lambda i: (0, 0)),             # fc1 bias column
            pl.BlockSpec((1, H), lambda i: (0, 0)),             # fc2 weight row
            pl.BlockSpec(memory_space=pltpu.MemorySpace.SMEM),  # fc2 bias scalar
        ],
        out_specs=pl.BlockSpec((1, block_n), lambda i: (0, i)),
        compiler_params=pltpu.CompilerParams(
            dimension_semantics=("parallel",)),
    )(xf, params["w1"], params["b1"], params["w2"], params["b2"])

    return out[0, :N].reshape(orig_shape[:-1] + (1,))


def init_params(key, input_dim, hidden_dim=256):
    """Deterministic synthetic parameters in PyTorch-equivalent layouts."""
    ks = jax.random.split(key, 4)
    scale = 0.02

    fc1_w = (scale * jax.random.normal(ks[0], (hidden_dim, input_dim))).astype(jnp.float32)
    fc1_b = (scale * jax.random.normal(ks[1], (hidden_dim,))).astype(jnp.float32)
    fc2_w = (scale * jax.random.normal(ks[2], (1, hidden_dim))).astype(jnp.float32)
    fc2_b = (scale * jax.random.normal(ks[3], (1,))).astype(jnp.float32)

    return {
        "w1": fc1_w,                            # (H, E)  -- PyTorch fc1.weight
        "b1": fc1_b.reshape(hidden_dim, 1),     # (H, 1)
        "w2": fc2_w,                            # (1, H)  -- PyTorch fc2.weight (native)
        "b2": fc2_b,                            # (1,)    -- scalar, lives in SMEM
    }


def reference_forward(x, params):
    """Pure-JAX reference (same math as torch.nn.Sequential(Linear, ReLU, Linear))."""
    orig_shape = x.shape
    E = orig_shape[-1]
    xf = x.reshape(-1, E)
    h = jnp.maximum(xf @ params["w1"].T + params["b1"].T, 0.0)   # (N, H)
    y = h @ params["w2"].T + params["b2"]                        # (N, 1)
    return y.reshape(orig_shape[:-1] + (1,))


if __name__ == "__main__":
    B, S, E = 4, 256, 32         # 1024 token rows -> 2 grid steps at block_n=512
    HIDDEN = 256                 # module default hidden_dim

    key = jax.random.PRNGKey(0)
    kx, kp, kx2 = jax.random.split(key, 3)
    params = init_params(kp, E, HIDDEN)

    # Case 1: token count divisible by the tile.
    x = jax.random.normal(kx, (B, S, E), dtype=jnp.float32)
    out = jax.block_until_ready(mlp_projector_forward(x, params))
    ref = reference_forward(x, params)
    assert out.shape == (B, S, 1), out.shape
    assert jnp.allclose(out, ref, atol=1e-4, rtol=1e-4), \
        float(jnp.max(jnp.abs(out - ref)))

    # Case 2: ragged token count (N=150, not a multiple of block_n) exercises
    # the in-kernel tail handling (grid = cdiv, garbage tail columns sliced off).
    x2 = jax.random.normal(kx2, (3, 50, E), dtype=jnp.float32)
    out2 = jax.block_until_ready(mlp_projector_forward(x2, params))
    ref2 = reference_forward(x2, params)
    assert out2.shape == (3, 50, 1), out2.shape
    assert jnp.allclose(out2, ref2, atol=1e-4, rtol=1e-4), \
        float(jnp.max(jnp.abs(out2 - ref2)))

    print("KERNEL_OK")
</pallas_src>

<mosaic_0001>
module attributes {stable_mosaic.version = 11 : i64} {
  func.func @_mlp_projector_kernel(%arg0: i32, %arg1: memref<512x32xf32, #tpu.memory_space<vmem>>, %arg2: memref<256x32xf32, #tpu.memory_space<vmem>>, %arg3: memref<256x1xf32, #tpu.memory_space<vmem>>, %arg4: memref<1x256xf32, #tpu.memory_space<vmem>>, %arg5: memref<1xf32, #tpu.memory_space<smem>>, %arg6: memref<1x512xf32, #tpu.memory_space<vmem>>) attributes {dimension_semantics = [#tpu.dimension_semantics<parallel>], iteration_bounds = array<i64: 2>, scalar_prefetch = 0 : i64, scratch_operands = 0 : i64, tpu.core_type = #tpu.core_type<tc>, window_params = [{transform_indices = @transform_0, window_bounds = array<i64: 512, 32>}, {pipeline_mode = #tpu.pipeline_mode<synchronous>, transform_indices = @transform_1, window_bounds = array<i64: 256, 32>}, {pipeline_mode = #tpu.pipeline_mode<synchronous>, transform_indices = @transform_2, window_bounds = array<i64: 256, 1>}, {pipeline_mode = #tpu.pipeline_mode<synchronous>, transform_indices = @transform_3, window_bounds = array<i64: 1, 256>}, {transform_indices = @transform_4, window_bounds = array<i64: 1>}, {transform_indices = @transform_5, window_bounds = array<i64: 1, 512>}]} {
    %c0 = arith.constant 0 : index
    %c0_0 = arith.constant 0 : index
    %0 = vector.load %arg1[%c0, %c0_0] : memref<512x32xf32, #tpu.memory_space<vmem>>, vector<512x32xf32>
    %c0_1 = arith.constant 0 : index
    %c0_2 = arith.constant 0 : index
    %1 = vector.load %arg2[%c0_1, %c0_2] : memref<256x32xf32, #tpu.memory_space<vmem>>, vector<256x32xf32>
    %cst = arith.constant dense<0.000000e+00> : vector<256x512xf32>
    %2 = tpu.matmul %1, %0, %cst {dimension_numbers = #tpu.dot_dimension_numbers<[1], [1], [0], [0], [0, 0, 1, 0], [], []>} : vector<256x32xf32>, vector<512x32xf32>, vector<256x512xf32> -> vector<256x512xf32>
    %c0_3 = arith.constant 0 : index
    %c0_4 = arith.constant 0 : index
    %3 = vector.load %arg3[%c0_3, %c0_4] : memref<256x1xf32, #tpu.memory_space<vmem>>, vector<256x1xf32>
    %4 = vector.broadcast %3 : vector<256x1xf32> to vector<256x512xf32>
    %5 = arith.addf %2, %4 : vector<256x512xf32>
    %cst_5 = arith.constant 0.000000e+00 : f32
    %6 = vector.broadcast %cst_5 : f32 to vector<256x512xf32>
    %7 = arith.maximumf %5, %6 : vector<256x512xf32>
    %c0_6 = arith.constant 0 : index
    %c0_7 = arith.constant 0 : index
    %8 = vector.load %arg4[%c0_6, %c0_7] : memref<1x256xf32, #tpu.memory_space<vmem>>, vector<1x256xf32>
    %cst_8 = arith.constant dense<0.000000e+00> : vector<1x512xf32>
    %9 = tpu.matmul %8, %7, %cst_8 {dimension_numbers = #tpu.dot_dimension_numbers<[1], [0], [0], [1], [0, 0, 1, 1], [], []>} : vector<1x256xf32>, vector<256x512xf32>, vector<1x512xf32> -> vector<1x512xf32>
    %c0_9 = arith.constant 0 : index
    %10 = memref.load %arg5[%c0_9] : memref<1xf32, #tpu.memory_space<smem>>
    %11 = vector.broadcast %10 : f32 to vector<1x512xf32>
    %12 = arith.addf %9, %11 : vector<1x512xf32>
    %c0_10 = arith.constant 0 : index
    %c0_11 = arith.constant 0 : index
    %13 = vector.load %arg6[%c0_10, %c0_11] : memref<1x512xf32, #tpu.memory_space<vmem>>, vector<1x512xf32>
    tpu.vector_store %arg6[%c0_10, %c0_11], %12 {strides = array<i32>} : memref<1x512xf32, #tpu.memory_space<vmem>>, vector<1x512xf32>,
    return
  }
  func.func @transform_0(%arg0: i32) -> (i32, i32) {
    %c0_i32 = arith.constant 0 : i32
    %c0_i32_0 = arith.constant 0 : i32
    return %arg0, %c0_i32 : i32, i32
  }
  func.func @transform_1(%arg0: i32) -> (i32, i32) {
    %c0_i32 = arith.constant 0 : i32
    %c0_i32_0 = arith.constant 0 : i32
    %c0_i32_1 = arith.constant 0 : i32
    return %c0_i32, %c0_i32_0 : i32, i32
  }
  func.func @transform_2(%arg0: i32) -> (i32, i32) {
    %c0_i32 = arith.constant 0 : i32
    %c0_i32_0 = arith.constant 0 : i32
    %c0_i32_1 = arith.constant 0 : i32
    return %c0_i32, %c0_i32_0 : i32, i32
  }
  func.func @transform_3(%arg0: i32) -> (i32, i32) {
    %c0_i32 = arith.constant 0 : i32
    %c0_i32_0 = arith.constant 0 : i32
    %c0_i32_1 = arith.constant 0 : i32
    return %c0_i32, %c0_i32_0 : i32, i32
  }
  func.func @transform_4(%arg0: i32) -> i32 {
    %c0_i32 = arith.constant 0 : i32
    %c0_i32_0 = arith.constant 0 : i32
    return %c0_i32 : i32
  }
  func.func @transform_5(%arg0: i32) -> (i32, i32) {
    %c0_i32 = arith.constant 0 : i32
    %c0_i32_0 = arith.constant 0 : i32
    return %c0_i32, %arg0 : i32, i32
  }
}

</mosaic_0001>

<llo_original>
// kernel: tpu_custom_call.1
$region0: #{tpu_custom_call.1}
  #allocation0 [shape = 'u32[]', space=smem, size = 0x4, offset = 0x4, fixed_abs, tag = 'smem constant byte address 0x4 - core index']
  #allocation1 [shape = 'u32[144,128]{1,0:T(1,128)}', space=vmem, size = 0x12000, scoped, tag = 'internal scratch']
  #allocation2 [shape = 'f32[1]{0:T(128)S(6)}', space=smem, size = 0x200, scoped, tag = 'scoped memory for tpu_custom_call.1']
  %s0 = inlined_call_operand.vmem [shape: f32[1024,32], index: 0, kind: input, shape index: {}]
  %s1 = inlined_call_operand.vmem [shape: f32[256,32], index: 1, kind: input, shape index: {}]
  %s2 = inlined_call_operand.vmem [shape: f32[256,1], index: 2, kind: input, shape index: {}]
  %s3 = inlined_call_operand.vmem [shape: f32[1,256], index: 3, kind: input, shape index: {}]
  %s4 = inlined_call_operand.<no memory space> [shape: f32[1], index: 4, kind: input, shape index: {}]
  %s5 = inlined_call_operand.hbm [shape: f32[1,1024], index: 5, kind: output, shape index: {}]
  %s6 = sld [smem:[#allocation0]]
  $region53: #{tpu_custom_call.1} parent=0
    _
  %s8 = ssub.s32 1, %s6
  %s9 = scalar_select 0, %s8, %s6
  %10 = sst [smem:[#allocation2]] %s4
  $region1: #{tpu_custom_call.1} parent=0
    #allocation3 [shape = 'u8[4096]{0}', space=vmem, size = 0x1000, scoped, tag = 'output window, operand 0']
    #allocation4 [shape = 's32[2]{0}', space=sflag, size = 0x8, scoped, tag = 'scoped memory for tpu_custom_call.1']
    %11 = vsyncpa [#allocation4], 0
    %s12 = scalar_lea.sflag [#allocation4], 1
    %13 = vsyncpa %s12, 0
    loop: start=0, step=1, limit=4
    $region2: #{tpu_custom_call.1} parent=1 // loop_pre_header
      _
    $region3: #{tpu_custom_call.1} parent=1 // loop_header
      %s15 = sphi 0, %s19
      %p16 = scmp.ge.s32.totalorder %s15, 4
      %s25 = sphi 0, %s27
      %s28 = sphi 0, %s25
      %s29 = sphi 0, %s28
      %s45 = sphi 0, %s29
      %s49 = sphi 0, %s49
      %s51 = sphi 0, %s49
      %s52 = sphi 0, %s51
      %s66 = sphi 0, %s52
      %s70 = sphi 0, %s70
      %s72 = sphi 0, %s70
      %s73 = sphi 0, %s72
      %s87 = sphi 0, %s73
      %s91 = sphi 0, %s91
      %s93 = sphi 0, %s91
      %s94 = sphi 0, %s93
      %s108 = sphi 0, %s94
      %s112 = sphi 0, %s112
      %s114 = sphi 0, %s112
      %s115 = sphi 0, %s114
      %s129 = sphi 0, %s115
      %s135 = sphi 0, %s137
      %s138 = sphi 0, %s135
      %s139 = sphi 0, %s138
      %s155 = sphi 0, %s139
    $region4: #{tpu_custom_call.1} parent=1 // loop_header_branch
      %18 = sbr.rel (%p16) target = $region8
    $region5: #{tpu_custom_call.1} parent=1 // loop_body
      %s20 = ssub.s32 %s15, 1
      %s21 = ssub.s32 %s15, 2
      %s22 = sadd.s32 %s15, 1
      %s23 = ssub.s32 %s15, %s22
      %p24 = scmp.eq.s32.totalorder %s23, 0
      %s26 = sadd.s32 %s25, 1
      %s27 = scalar_select %p24, %s25, %s26
      %p30 = pneg %p24
      %p31 = scmp.eq.s32.totalorder %s15, 1
      %p32 = por %p30, %p31
      %p33 = scmp.ne.s32.totalorder %s25, %s28
      %p34 = scmp.eq.s32.totalorder %s15, 0
      %p35 = por %p33, %p34
      %p36 = scmp.ne.s32.totalorder %s25, %s28
      %p37 = scmp.eq.s32.totalorder %s20, 1
      %p38 = por %p36, %p37
      %p39 = scmp.ne.s32.totalorder %s28, %s29
      %p40 = scmp.eq.s32.totalorder %s20, 0
      %p41 = por %p39, %p40
      %p42 = scmp.ne.s32.totalorder %s28, %s29
      %p43 = scmp.eq.s32.totalorder %s21, 1
      %p44 = por %p42, %p43
      %p46 = scmp.ne.s32.totalorder %s29, %s45
      %p47 = scmp.eq.s32.totalorder %s21, 0
      %p48 = por %p46, %p47
      %s50 = sadd.s32 %s49, 1
      %p53 = scmp.eq.s32.totalorder %s15, 1
      %p54 = scmp.ne.s32.totalorder %s49, %s51
      %p55 = scmp.eq.s32.totalorder %s15, 0
      %p56 = por %p54, %p55
      %p57 = scmp.ne.s32.totalorder %s49, %s51
      %p58 = scmp.eq.s32.totalorder %s20, 1
      %p59 = por %p57, %p58
      %p60 = scmp.ne.s32.totalorder %s51, %s52
      %p61 = scmp.eq.s32.totalorder %s20, 0
      %p62 = por %p60, %p61
      %p63 = scmp.ne.s32.totalorder %s51, %s52
      %p64 = scmp.eq.s32.totalorder %s21, 1
      %p65 = por %p63, %p64
      %p67 = scmp.ne.s32.totalorder %s52, %s66
      %p68 = scmp.eq.s32.totalorder %s21, 0
      %p69 = por %p67, %p68
      %s71 = sadd.s32 %s70, 1
      %p74 = scmp.eq.s32.totalorder %s15, 1
      %p75 = scmp.ne.s32.totalorder %s70, %s72
      %p76 = scmp.eq.s32.totalorder %s15, 0
      %p77 = por %p75, %p76
      %p78 = scmp.ne.s32.totalorder %s70, %s72
      %p79 = scmp.eq.s32.totalorder %s20, 1
      %p80 = por %p78, %p79
      %p81 = scmp.ne.s32.totalorder %s72, %s73
      %p82 = scmp.eq.s32.totalorder %s20, 0
      %p83 = por %p81, %p82
      %p84 = scmp.ne.s32.totalorder %s72, %s73
      %p85 = scmp.eq.s32.totalorder %s21, 1
      %p86 = por %p84, %p85
      %p88 = scmp.ne.s32.totalorder %s73, %s87
      %p89 = scmp.eq.s32.totalorder %s21, 0
      %p90 = por %p88, %p89
      %s92 = sadd.s32 %s91, 1
      %p95 = scmp.eq.s32.totalorder %s15, 1
      %p96 = scmp.ne.s32.totalorder %s91, %s93
      %p97 = scmp.eq.s32.totalorder %s15, 0
      %p98 = por %p96, %p97
      %p99 = scmp.ne.s32.totalorder %s91, %s93
      %p100 = scmp.eq.s32.totalorder %s20, 1
      %p101 = por %p99, %p100
      %p102 = scmp.ne.s32.totalorder %s93, %s94
      %p103 = scmp.eq.s32.totalorder %s20, 0
      %p104 = por %p102, %p103
      %p105 = scmp.ne.s32.totalorder %s93, %s94
      %p106 = scmp.eq.s32.totalorder %s21, 1
      %p107 = por %p105, %p106
      %p109 = scmp.ne.s32.totalorder %s94, %s108
      %p110 = scmp.eq.s32.totalorder %s21, 0
      %p111 = por %p109, %p110
      %s113 = sadd.s32 %s112, 1
      %p116 = scmp.eq.s32.totalorder %s15, 1
      %p117 = scmp.ne.s32.totalorder %s112, %s114
      %p118 = scmp.eq.s32.totalorder %s15, 0
      %p119 = por %p117, %p118
      %p120 = scmp.ne.s32.totalorder %s112, %s114
      %p121 = scmp.eq.s32.totalorder %s20, 1
      %p122 = por %p120, %p121
      %p123 = scmp.ne.s32.totalorder %s114, %s115
      %p124 = scmp.eq.s32.totalorder %s20, 0
      %p125 = por %p123, %p124
      %p126 = scmp.ne.s32.totalorder %s114, %s115
      %p127 = scmp.eq.s32.totalorder %s21, 1
      %p128 = por %p126, %p127
      %p130 = scmp.ne.s32.totalorder %s115, %s129
      %p131 = scmp.eq.s32.totalorder %s21, 0
      %p132 = por %p130, %p131
      %s133 = ssub.s32 %s15, %s22
      %p134 = scmp.eq.s32.totalorder %s133, 0
      %s136 = sadd.s32 %s135, 1
      %s137 = scalar_select %p134, %s135, %s136
      %p140 = pneg %p134
      %p141 = scmp.eq.s32.totalorder %s15, 1
      %p142 = por %p140, %p141
      %p143 = scmp.ne.s32.totalorder %s135, %s138
      %p144 = scmp.eq.s32.totalorder %s15, 0
      %p145 = por %p143, %p144
      %p146 = scmp.ne.s32.totalorder %s135, %s138
      %p147 = scmp.eq.s32.totalorder %s20, 1
      %p148 = por %p146, %p147
      %p149 = scmp.ne.s32.totalorder %s138, %s139
      %p150 = scmp.eq.s32.totalorder %s20, 0
      %p151 = por %p149, %p150
      %p152 = scmp.ne.s32.totalorder %s138, %s139
      %p153 = scmp.eq.s32.totalorder %s21, 1
      %p154 = por %p152, %p153
      %p156 = scmp.ne.s32.totalorder %s139, %s155
      %p157 = scmp.eq.s32.totalorder %s21, 0
      %p158 = por %p156, %p157
      %p159 = scmp.le.s32.totalorder 1, %s15
      %p160 = scmp.lt.s32.totalorder %s15, 3
      %p161 = pnand %p159, %p160
      %p162 = pneg %p161
      // Predicated region
      $region9: #{tpu_custom_call.1} parent=5 // pred_check
        _
      $region10: #{tpu_custom_call.1} parent=5 // pred_check_branch
        %164 = sbr.rel (%p161) target = $region12
      $region11: #{tpu_custom_call.1} parent=5 // pred_region
        %s165 = ssub.s32 %s15, 1
        // Predicated region
        $region13: #{tpu_custom_call.1} parent=11 // pred_check
          %p166 = pneg %p62
        $region14: #{tpu_custom_call.1} parent=11 // pred_check_branch
          %168 = sbr.rel (%p166) target = $region16
        $region15: #{tpu_custom_call.1} parent=11 // pred_region
          _
        $region16: #{tpu_custom_call.1} parent=11 // pred_fallthru
          _
        // Predicated region
        $region17: #{tpu_custom_call.1} parent=11 // pred_check
          %p169 = pneg %p83
        $region18: #{tpu_custom_call.1} parent=11 // pred_check_branch
          %171 = sbr.rel (%p169) target = $region20
        $region19: #{tpu_custom_call.1} parent=11 // pred_region
          _
        $region20: #{tpu_custom_call.1} parent=11 // pred_fallthru
          _
        // Predicated region
        $region21: #{tpu_custom_call.1} parent=11 // pred_check
          %p172 = pneg %p104
        $region22: #{tpu_custom_call.1} parent=11 // pred_check_branch
          %174 = sbr.rel (%p172) target = $region24
        $region23: #{tpu_custom_call.1} parent=11 // pred_region
          _
        $region24: #{tpu_custom_call.1} parent=11 // pred_fallthru
          _
        // Predicated region
        $region25: #{tpu_custom_call.1} parent=11 // pred_check
          %p175 = pneg %p125
        $region26: #{tpu_custom_call.1} parent=11 // pred_check_branch
          %177 = sbr.rel (%p175) target = $region28
        $region27: #{tpu_custom_call.1} parent=11 // pred_region
          _
        $region28: #{tpu_custom_call.1} parent=11 // pred_fallthru
          _
      $region12: #{tpu_custom_call.1} parent=5 // pred_fallthru
        _
      %p178 = scmp.lt.s32.totalorder %s15, 2
      // Predicated region
      $region29: #{tpu_custom_call.1} parent=5 // pred_check
        %p179 = pneg %p178
      $region30: #{tpu_custom_call.1} parent=5 // pred_check_branch
        %181 = sbr.rel (%p179) target = $region32
      $region31: #{tpu_custom_call.1} parent=5 // pred_region
        // Predicated region
        $region33: #{tpu_custom_call.1} parent=31 // pred_check
          %p182 = pneg %p35
        $region34: #{tpu_custom_call.1} parent=31 // pred_check_branch
          %184 = sbr.rel (%p182) target = $region36
        $region35: #{tpu_custom_call.1} parent=31 // pred_region
          %s185 = smul.u32 64, %s15
          %p186 = scmp.lt.s32.totalorder %s185, 127
          %s187 = scalar_select %p186, %s185, 127
          %s188 = smul.addr %s187, 8
          %s189 = scalar_lea.vmem %s0, %s188
          %s190 = smul.u32 64, %s15
        $region36: #{tpu_custom_call.1} parent=31 // pred_fallthru
          _
      $region32: #{tpu_custom_call.1} parent=5 // pred_fallthru
        _
      %p191 = scmp.le.s32.totalorder 1, %s15
      %p192 = scmp.lt.s32.totalorder %s15, 3
      %p193 = pnand %p191, %p192
      %p194 = pneg %p193
      // Predicated region
      $region37: #{tpu_custom_call.1} parent=5 // pred_check
        _
      $region38: #{tpu_custom_call.1} parent=5 // pred_check_branch
        %196 = sbr.rel (%p193) target = $region40
      $region39: #{tpu_custom_call.1} parent=5 // pred_region
        %s197 = ssub.s32 %s15, 1
        %s198 = smul.u32 64, %s20
        %p199 = scmp.lt.s32.totalorder %s198, 127
        %s200 = scalar_select %p199, %s198, 127
        %s201 = smul.addr %s200, 8
        %s202 = scalar_lea.vmem %s0, %s201
        %p203 = pneg %p41
        %p204 = pneg %p38
        %p205 = pneg %p62
        %p206 = pneg %p59
        %p207 = pneg %p83
        %p208 = pneg %p80
        %p209 = pneg %p104
        %p210 = pneg %p101
        %p211 = pneg %p125
        %p212 = pneg %p122
        %p213 = pneg %p151
        %p214 = pneg %p148
        %s215 = sand.u32 %s138, 1
        %s216 = scalar_lea.sflag [#allocation4], %s215
        %s217 = sand.u32 %s138, 1
        %s218 = smul.addr %s217, 4
        %s219 = scalar_lea.vmem [#allocation3], %s218
        %s220 = smul.u32 64, %s20
        %p221 = scmp.lt.s32.totalorder %s220, 127
        %s222 = scalar_select %p221, %s220, 127
        %s223 = smul.addr %s222, 8
        %s224 = scalar_lea.vmem %s0, %s223
        %s225 = smul.u32 64, %s20
        %s226 = smul.u32 4, %s20
        %v227 = vld [vmem:[%s224] sm:$0xff]
        %v228 = vld [vmem:[%s224 + $0x8] sm:$0xff]
        %v229 = vld [vmem:[%s224 + $0x10] sm:$0xff]
        %v230 = vld [vmem:[%s224 + $0x18] sm:$0xff]
        %v231 = vld [vmem:[%s224 + $0x20] sm:$0xff]
        %v232 = vld [vmem:[%s224 + $0x28] sm:$0xff]
        %v233 = vld [vmem:[%s224 + $0x30] sm:$0xff]
        %v234 = vld [vmem:[%s224 + $0x38] sm:$0xff]
        %v235 = vld [vmem:[%s224 + $0x40] sm:$0xff]
        %v236 = vld [vmem:[%s224 + $0x48] sm:$0xff]
        %v237 = vld [vmem:[%s224 + $0x50] sm:$0xff]
        %v238 = vld [vmem:[%s224 + $0x58] sm:$0xff]
        %v239 = vld [vmem:[%s224 + $0x60] sm:$0xff]
        %v240 = vld [vmem:[%s224 + $0x68] sm:$0xff]
        %v241 = vld [vmem:[%s224 + $0x70] sm:$0xff]
        %v242 = vld [vmem:[%s224 + $0x78] sm:$0xff]
        %v243 = vld [vmem:[%s224 + $0x80] sm:$0xff]
        %v244 = vld [vmem:[%s224 + $0x88] sm:$0xff]
        %v245 = vld [vmem:[%s224 + $0x90] sm:$0xff]
        %v246 = vld [vmem:[%s224 + $0x98] sm:$0xff]
        %v247 = vld [vmem:[%s224 + $0xa0] sm:$0xff]
        %v248 = vld [vmem:[%s224 + $0xa8] sm:$0xff]
        %v249 = vld [vmem:[%s224 + $0xb0] sm:$0xff]
        %v250 = vld [vmem:[%s224 + $0xb8] sm:$0xff]
        %v251 = vld [vmem:[%s224 + $0xc0] sm:$0xff]
        %v252 = vld [vmem:[%s224 + $0xc8] sm:$0xff]
        %v253 = vld [vmem:[%s224 + $0xd0] sm:$0xff]
        %v254 = vld [vmem:[%s224 + $0xd8] sm:$0xff]
        %v255 = vld [vmem:[%s224 + $0xe0] sm:$0xff]
        %v256 = vld [vmem:[%s224 + $0xe8] sm:$0xff]
        %v257 = vld [vmem:[%s224 + $0xf0] sm:$0xff]
        %v258 = vld [vmem:[%s224 + $0xf8] sm:$0xff]
        %v259 = vld [vmem:[%s224 + $0x100] sm:$0xff]
        %v260 = vld [vmem:[%s224 + $0x108] sm:$0xff]
        %v261 = vld [vmem:[%s224 + $0x110] sm:$0xff]
        %v262 = vld [vmem:[%s224 + $0x118] sm:$0xff]
        %v263 = vld [vmem:[%s224 + $0x120] sm:$0xff]
        %v264 = vld [vmem:[%s224 + $0x128] sm:$0xff]
        %v265 = vld [vmem:[%s224 + $0x130] sm:$0xff]
        %v266 = vld [vmem:[%s224 + $0x138] sm:$0xff]
        %v267 = vld [vmem:[%s224 + $0x140] sm:$0xff]
        %v268 = vld [vmem:[%s224 + $0x148] sm:$0xff]
        %v269 = vld [vmem:[%s224 + $0x150] sm:$0xff]
        %v270 = vld [vmem:[%s224 + $0x158] sm:$0xff]
        %v271 = vld [vmem:[%s224 + $0x160] sm:$0xff]
        %v272 = vld [vmem:[%s224 + $0x168] sm:$0xff]
        %v273 = vld [vmem:[%s224 + $0x170] sm:$0xff]
        %v274 = vld [vmem:[%s224 + $0x178] sm:$0xff]
        %v275 = vld [vmem:[%s224 + $0x180] sm:$0xff]
        %v276 = vld [vmem:[%s224 + $0x188] sm:$0xff]
        %v277 = vld [vmem:[%s224 + $0x190] sm:$0xff]
        %v278 = vld [vmem:[%s224 + $0x198] sm:$0xff]
        %v279 = vld [vmem:[%s224 + $0x1a0] sm:$0xff]
        %v280 = vld [vmem:[%s224 + $0x1a8] sm:$0xff]
        %v281 = vld [vmem:[%s224 + $0x1b0] sm:$0xff]
        %v282 = vld [vmem:[%s224 + $0x1b8] sm:$0xff]
        %v283 = vld [vmem:[%s224 + $0x1c0] sm:$0xff]
        %v284 = vld [vmem:[%s224 + $0x1c8] sm:$0xff]
        %v285 = vld [vmem:[%s224 + $0x1d0] sm:$0xff]
        %v286 = vld [vmem:[%s224 + $0x1d8] sm:$0xff]
        %v287 = vld [vmem:[%s224 + $0x1e0] sm:$0xff]
        %v288 = vld [vmem:[%s224 + $0x1e8] sm:$0xff]
        %v289 = vld [vmem:[%s224 + $0x1f0] sm:$0xff]
        %v290 = vld [vmem:[%s224 + $0x1f8] sm:$0xff]
        %v291 = vld [vmem:[%s1] sm:$0xff]
        %v292 = vld [vmem:[%s1 + $0x8] sm:$0xff]
        %v293 = vld [vmem:[%s1 + $0x10] sm:$0xff]
        %v294 = vld [vmem:[%s1 + $0x18] sm:$0xff]
        %v295 = vld [vmem:[%s1 + $0x20] sm:$0xff]
        %v296 = vld [vmem:[%s1 + $0x28] sm:$0xff]
        %v297 = vld [vmem:[%s1 + $0x30] sm:$0xff]
        %v298 = vld [vmem:[%s1 + $0x38] sm:$0xff]
        %v299 = vld [vmem:[%s1 + $0x40] sm:$0xff]
        %v300 = vld [vmem:[%s1 + $0x48] sm:$0xff]
        %v301 = vld [vmem:[%s1 + $0x50] sm:$0xff]
        %v302 = vld [vmem:[%s1 + $0x58] sm:$0xff]
        %v303 = vld [vmem:[%s1 + $0x60] sm:$0xff]
        %v304 = vld [vmem:[%s1 + $0x68] sm:$0xff]
        %v305 = vld [vmem:[%s1 + $0x70] sm:$0xff]
        %v306 = vld [vmem:[%s1 + $0x78] sm:$0xff]
        %v307 = vld [vmem:[%s1 + $0x80] sm:$0xff]
        %v308 = vld [vmem:[%s1 + $0x88] sm:$0xff]
        %v309 = vld [vmem:[%s1 + $0x90] sm:$0xff]
        %v310 = vld [vmem:[%s1 + $0x98] sm:$0xff]
        %v311 = vld [vmem:[%s1 + $0xa0] sm:$0xff]
        %v312 = vld [vmem:[%s1 + $0xa8] sm:$0xff]
        %v313 = vld [vmem:[%s1 + $0xb0] sm:$0xff]
        %v314 = vld [vmem:[%s1 + $0xb8] sm:$0xff]
        %v315 = vld [vmem:[%s1 + $0xc0] sm:$0xff]
        %v316 = vld [vmem:[%s1 + $0xc8] sm:$0xff]
        %v317 = vld [vmem:[%s1 + $0xd0] sm:$0xff]
        %v318 = vld [vmem:[%s1 + $0xd8] sm:$0xff]
        %v319 = vld [vmem:[%s1 + $0xe0] sm:$0xff]
        %v320 = vld [vmem:[%s1 + $0xe8] sm:$0xff]
        %v321 = vld [vmem:[%s1 + $0xf0] sm:$0xff]
        %v322 = vld [vmem:[%s1 + $0xf8] sm:$0xff]
        %v323 = vld [vmem:[%s2] sm:$0xff]
        %v324 = vld [vmem:[%s2 + $0x8] sm:$0xff]
        %v325 = vld [vmem:[%s2 + $0x10] sm:$0xff]
        %v326 = vld [vmem:[%s2 + $0x18] sm:$0xff]
        %v327 = vld [vmem:[%s2 + $0x20] sm:$0xff]
        %v328 = vld [vmem:[%s2 + $0x28] sm:$0xff]
        %v329 = vld [vmem:[%s2 + $0x30] sm:$0xff]
        %v330 = vld [vmem:[%s2 + $0x38] sm:$0xff]
        %v331 = vld [vmem:[%s2 + $0x40] sm:$0xff]
        %v332 = vld [vmem:[%s2 + $0x48] sm:$0xff]
        %v333 = vld [vmem:[%s2 + $0x50] sm:$0xff]
        %v334 = vld [vmem:[%s2 + $0x58] sm:$0xff]
        %v335 = vld [vmem:[%s2 + $0x60] sm:$0xff]
        %v336 = vld [vmem:[%s2 + $0x68] sm:$0xff]
        %v337 = vld [vmem:[%s2 + $0x70] sm:$0xff]
        %v338 = vld [vmem:[%s2 + $0x78] sm:$0xff]
        %v339 = vld [vmem:[%s2 + $0x80] sm:$0xff]
        %v340 = vld [vmem:[%s2 + $0x88] sm:$0xff]
        %v341 = vld [vmem:[%s2 + $0x90] sm:$0xff]
        %v342 = vld [vmem:[%s2 + $0x98] sm:$0xff]
        %v343 = vld [vmem:[%s2 + $0xa0] sm:$0xff]
        %v344 = vld [vmem:[%s2 + $0xa8] sm:$0xff]
        %v345 = vld [vmem:[%s2 + $0xb0] sm:$0xff]
        %v346 = vld [vmem:[%s2 + $0xb8] sm:$0xff]
        %v347 = vld [vmem:[%s2 + $0xc0] sm:$0xff]
        %v348 = vld [vmem:[%s2 + $0xc8] sm:$0xff]
        %v349 = vld [vmem:[%s2 + $0xd0] sm:$0xff]
        %v350 = vld [vmem:[%s2 + $0xd8] sm:$0xff]
        %v351 = vld [vmem:[%s2 + $0xe0] sm:$0xff]
        %v352 = vld [vmem:[%s2 + $0xe8] sm:$0xff]
        %v353 = vld [vmem:[%s2 + $0xf0] sm:$0xff]
        %v354 = vld [vmem:[%s2 + $0xf8] sm:$0xff]
        %356 = vset.pattern.permute.xlu0 0
        %357 = vperm.xlu0 %356, %v323
        %v358 = vpop.permute.xlu0 %357
        %361 = vset.pattern.permute.xlu0 0
        %362 = vperm.xlu0 %361, %v324
        %v363 = vpop.permute.xlu0 %362
        %366 = vset.pattern.permute.xlu0 0
        %367 = vperm.xlu0 %366, %v325
        %v368 = vpop.permute.xlu0 %367
        %371 = vset.pattern.permute.xlu0 0
        %372 = vperm.xlu0 %371, %v326
        %v373 = vpop.permute.xlu0 %372
        %376 = vset.pattern.permute.xlu0 0
        %377 = vperm.xlu0 %376, %v327
        %v378 = vpop.permute.xlu0 %377
        %381 = vset.pattern.permute.xlu0 0
        %382 = vperm.xlu0 %381, %v328
        %v383 = vpop.permute.xlu0 %382
        %386 = vset.pattern.permute.xlu0 0
        %387 = vperm.xlu0 %386, %v329
        %v388 = vpop.permute.xlu0 %387
        %391 = vset.pattern.permute.xlu0 0
        %392 = vperm.xlu0 %391, %v330
        %v393 = vpop.permute.xlu0 %392
        %396 = vset.pattern.permute.xlu0 0
        %397 = vperm.xlu0 %396, %v331
        %v398 = vpop.permute.xlu0 %397
        %401 = vset.pattern.permute.xlu0 0
        %402 = vperm.xlu0 %401, %v332
        %v403 = vpop.permute.xlu0 %402
        %406 = vset.pattern.permute.xlu0 0
        %407 = vperm.xlu0 %406, %v333
        %v408 = vpop.permute.xlu0 %407
        %411 = vset.pattern.permute.xlu0 0
        %412 = vperm.xlu0 %411, %v334
        %v413 = vpop.permute.xlu0 %412
        %416 = vset.pattern.permute.xlu0 0
        %417 = vperm.xlu0 %416, %v335
        %v418 = vpop.permute.xlu0 %417
        %421 = vset.pattern.permute.xlu0 0
        %422 = vperm.xlu0 %421, %v336
        %v423 = vpop.permute.xlu0 %422
        %426 = vset.pattern.permute.xlu0 0
        %427 = vperm.xlu0 %426, %v337
        %v428 = vpop.permute.xlu0 %427
        %431 = vset.pattern.permute.xlu0 0
        %432 = vperm.xlu0 %431, %v338
        %v433 = vpop.permute.xlu0 %432
        %436 = vset.pattern.permute.xlu0 0
        %437 = vperm.xlu0 %436, %v339
        %v438 = vpop.permute.xlu0 %437
        %441 = vset.pattern.permute.xlu0 0
        %442 = vperm.xlu0 %441, %v340
        %v443 = vpop.permute.xlu0 %442
        %446 = vset.pattern.permute.xlu0 0
        %447 = vperm.xlu0 %446, %v341
        %v448 = vpop.permute.xlu0 %447
        %451 = vset.pattern.permute.xlu0 0
        %452 = vperm.xlu0 %451, %v342
        %v453 = vpop.permute.xlu0 %452
        %456 = vset.pattern.permute.xlu0 0
        %457 = vperm.xlu0 %456, %v343
        %v458 = vpop.permute.xlu0 %457
        %461 = vset.pattern.permute.xlu0 0
        %462 = vperm.xlu0 %461, %v344
        %v463 = vpop.permute.xlu0 %462
        %466 = vset.pattern.permute.xlu0 0
        %467 = vperm.xlu0 %466, %v345
        %v468 = vpop.permute.xlu0 %467
        %471 = vset.pattern.permute.xlu0 0
        %472 = vperm.xlu0 %471, %v346
        %v473 = vpop.permute.xlu0 %472
        %476 = vset.pattern.permute.xlu0 0
        %477 = vperm.xlu0 %476, %v347
        %v478 = vpop.permute.xlu0 %477
        %481 = vset.pattern.permute.xlu0 0
        %482 = vperm.xlu0 %481, %v348
        %v483 = vpop.permute.xlu0 %482
        %486 = vset.pattern.permute.xlu0 0
        %487 = vperm.xlu0 %486, %v349
        %v488 = vpop.permute.xlu0 %487
        %491 = vset.pattern.permute.xlu0 0
        %492 = vperm.xlu0 %491, %v350
        %v493 = vpop.permute.xlu0 %492
        %496 = vset.pattern.permute.xlu0 0
        %497 = vperm.xlu0 %496, %v351
        %v498 = vpop.permute.xlu0 %497
        %501 = vset.pattern.permute.xlu0 0
        %502 = vperm.xlu0 %501, %v352
        %v503 = vpop.permute.xlu0 %502
        %506 = vset.pattern.permute.xlu0 0
        %507 = vperm.xlu0 %506, %v353
        %v508 = vpop.permute.xlu0 %507
        %511 = vset.pattern.permute.xlu0 0
        %512 = vperm.xlu0 %511, %v354
        %v513 = vpop.permute.xlu0 %512
        %vm515 = vcmask 261120
        %v517 = vsel %vm515, %v291, 0
        %v520 = vsel %vm515, %v292, 0
        %v523 = vsel %vm515, %v293, 0
        %v526 = vsel %vm515, %v294, 0
        %v529 = vsel %vm515, %v295, 0
        %v532 = vsel %vm515, %v296, 0
        %v535 = vsel %vm515, %v297, 0
        %v538 = vsel %vm515, %v298, 0
        %v541 = vsel %vm515, %v299, 0
        %v544 = vsel %vm515, %v300, 0
        %v547 = vsel %vm515, %v301, 0
        %v550 = vsel %vm515, %v302, 0
        %v553 = vsel %vm515, %v303, 0
        %v556 = vsel %vm515, %v304, 0
        %v559 = vsel %vm515, %v305, 0
        %v562 = vsel %vm515, %v306, 0
        %v565 = vsel %vm515, %v307, 0
        %v568 = vsel %vm515, %v308, 0
        %v571 = vsel %vm515, %v309, 0
        %v574 = vsel %vm515, %v310, 0
        %v577 = vsel %vm515, %v311, 0
        %v580 = vsel %vm515, %v312, 0
        %v583 = vsel %vm515, %v313, 0
        %v586 = vsel %vm515, %v314, 0
        %v589 = vsel %vm515, %v315, 0
        %v592 = vsel %vm515, %v316, 0
        %v595 = vsel %vm515, %v317, 0
        %v598 = vsel %vm515, %v318, 0
        %v601 = vsel %vm515, %v319, 0
        %v604 = vsel %vm515, %v320, 0
        %v607 = vsel %vm515, %v321, 0
        %v610 = vsel %vm515, %v322, 0
        %v613 = vsel %vm515, %v227, 0
        %v616 = vsel %vm515, %v228, 0
        %v619 = vsel %vm515, %v229, 0
        %v622 = vsel %vm515, %v230, 0
        %v625 = vsel %vm515, %v231, 0
        %v628 = vsel %vm515, %v232, 0
        %v631 = vsel %vm515, %v233, 0
        %v634 = vsel %vm515, %v234, 0
        %v637 = vsel %vm515, %v235, 0
        %v640 = vsel %vm515, %v236, 0
        %v643 = vsel %vm515, %v237, 0
        %v646 = vsel %vm515, %v238, 0
        %v649 = vsel %vm515, %v239, 0
        %v652 = vsel %vm515, %v240, 0
        %v655 = vsel %vm515, %v241, 0
        %v658 = vsel %vm515, %v242, 0
        %v661 = vsel %vm515, %v243, 0
        %v664 = vsel %vm515, %v244, 0
        %v667 = vsel %vm515, %v245, 0
        %v670 = vsel %vm515, %v246, 0
        %v673 = vsel %vm515, %v247, 0
        %v676 = vsel %vm515, %v248, 0
        %v679 = vsel %vm515, %v249, 0
        %v682 = vsel %vm515, %v250, 0
        %v685 = vsel %vm515, %v251, 0
        %v688 = vsel %vm515, %v252, 0
        %v691 = vsel %vm515, %v253, 0
        %v694 = vsel %vm515, %v254, 0
        %v697 = vsel %vm515, %v255, 0
        %v700 = vsel %vm515, %v256, 0
        %v703 = vsel %vm515, %v257, 0
        %v706 = vsel %vm515, %v258, 0
        %v709 = vsel %vm515, %v259, 0
        %v712 = vsel %vm515, %v260, 0
        %v715 = vsel %vm515, %v261, 0
        %v718 = vsel %vm515, %v262, 0
        %v721 = vsel %vm515, %v263, 0
        %v724 = vsel %vm515, %v264, 0
        %v727 = vsel %vm515, %v265, 0
        %v730 = vsel %vm515, %v266, 0
        %v733 = vsel %vm515, %v267, 0
        %v736 = vsel %vm515, %v268, 0
        %v739 = vsel %vm515, %v269, 0
        %v742 = vsel %vm515, %v270, 0
        %v745 = vsel %vm515, %v271, 0
        %v748 = vsel %vm515, %v272, 0
        %v751 = vsel %vm515, %v273, 0
        %v754 = vsel %vm515, %v274, 0
        %v757 = vsel %vm515, %v275, 0
        %v760 = vsel %vm515, %v276, 0
        %v763 = vsel %vm515, %v277, 0
        %v766 = vsel %vm515, %v278, 0
        %v769 = vsel %vm515, %v279, 0
        %v772 = vsel %vm515, %v280, 0
        %v775 = vsel %vm515, %v281, 0
        %v778 = vsel %vm515, %v282, 0
        %v781 = vsel %vm515, %v283, 0
        %v784 = vsel %vm515, %v284, 0
        %v787 = vsel %vm515, %v285, 0
        %v790 = vsel %vm515, %v286, 0
        %v793 = vsel %vm515, %v287, 0
        %v796 = vsel %vm515, %v288, 0
        %v799 = vsel %vm515, %v289, 0
        %v802 = vsel %vm515, %v290, 0
        %804 = vmatprep.subr.mxu0 0.0
        %805 = vmatpush1.xpose.msra.mxu0 %v658
        %806 = vmatprep.subr.mxu0 0.0
        %807 = vmatpush1.xpose.msra.mxu0 %v655
        %808 = vmatprep.subr.mxu0 0.0
        %809 = vmatpush1.xpose.msra.mxu0 %v652
        %810 = vmatprep.subr.mxu0 0.0
        %811 = vmatpush1.xpose.msra.mxu0 %v649
        %812 = vmatprep.subr.mxu0 0.0
        %813 = vmatpush1.xpose.msra.mxu0 %v646
        %814 = vmatprep.subr.mxu0 0.0
        %815 = vmatpush1.xpose.msra.mxu0 %v643
        %816 = vmatprep.subr.mxu0 0.0
        %817 = vmatpush1.xpose.msra.mxu0 %v640
        %818 = vmatprep.subr.mxu0 0.0
        %819 = vmatpush1.xpose.msra.mxu0 %v637
        %820 = vmatprep.subr.mxu0 0.0
        %821 = vmatpush1.xpose.msra.mxu0 %v634
        %822 = vmatprep.subr.mxu0 0.0
        %823 = vmatpush1.xpose.msra.mxu0 %v631
        %824 = vmatprep.subr.mxu0 0.0
        %825 = vmatpush1.xpose.msra.mxu0 %v628
        %826 = vmatprep.subr.mxu0 0.0
        %827 = vmatpush1.xpose.msra.mxu0 %v625
        %828 = vmatprep.subr.mxu0 0.0
        %829 = vmatpush1.xpose.msra.mxu0 %v622
        %830 = vmatprep.subr.mxu0 0.0
        %831 = vmatpush1.xpose.msra.mxu0 %v619
        %832 = vmatprep.subr.mxu0 0.0
        %833 = vmatpush1.xpose.msra.mxu0 %v616
        %834 = vmatprep.subr.mxu0 0.0
        %835 = vmatpush1.xpose.msra.mxu0 %v613
        %836 = vmatprep.subr.mxu0 0.0
        %837 = vmatpush2.xpose.msra.mxu0 %v706
        %838 = vmatprep.subr.mxu0 0.0
        %839 = vmatpush2.xpose.msra.mxu0 %v703
        %840 = vmatprep.subr.mxu0 0.0
        %841 = vmatpush2.xpose.msra.mxu0 %v700
        %842 = vmatprep.subr.mxu0 0.0
        %843 = vmatpush2.xpose.msra.mxu0 %v697
        %844 = vmatprep.subr.mxu0 0.0
        %845 = vmatpush2.xpose.msra.mxu0 %v694
        %846 = vmatprep.subr.mxu0 0.0
        %847 = vmatpush2.xpose.msra.mxu0 %v691
        %848 = vmatprep.subr.mxu0 0.0
        %849 = vmatpush2.xpose.msra.mxu0 %v688
        %850 = vmatprep.subr.mxu0 0.0
        %851 = vmatpush2.xpose.msra.mxu0 %v685
        %852 = vmatprep.subr.mxu0 0.0
        %853 = vmatpush2.xpose.msra.mxu0 %v682
        %854 = vmatprep.subr.mxu0 0.0
        %855 = vmatpush2.xpose.msra.mxu0 %v679
        %856 = vmatprep.subr.mxu0 0.0
        %857 = vmatpush2.xpose.msra.mxu0 %v676
        %858 = vmatprep.subr.mxu0 0.0
        %859 = vmatpush2.xpose.msra.mxu0 %v673
        %860 = vmatprep.subr.mxu0 0.0
        %861 = vmatpush2.xpose.msra.mxu0 %v670
        %862 = vmatprep.subr.mxu0 0.0
        %863 = vmatpush2.xpose.msra.mxu0 %v667
        %864 = vmatprep.subr.mxu0 0.0
        %865 = vmatpush2.xpose.msra.mxu0 %v664
        %866 = vmatprep.subr.mxu0 0.0
        %867 = vmatpush2.xpose.msra.mxu0 %v661
        %868 = vmatprep.mubr.f32.mxu0 0.0
        %869 = vmatmul.mubr.f32.gmra.mxu0 %v517
        %v870 = vpop.f32.mrf.mxu0
        %v871 = vadd.f32 %v358, %v870
        %v872 = vpop.f32.mrf.mxu0
        %v873 = vadd.f32 %v358, %v872
        %874 = vmatprep.mubr.f32.mxu0 0.0
        %875 = vmatmul.mubr.f32.gmra.mxu0 %v520
        %v876 = vpop.f32.mrf.mxu0
        %v877 = vadd.f32 %v363, %v876
        %v878 = vpop.f32.mrf.mxu0
        %v879 = vadd.f32 %v363, %v878
        %880 = vmatprep.mubr.f32.mxu0 0.0
        %881 = vmatmul.mubr.f32.gmra.mxu0 %v523
        %v882 = vpop.f32.mrf.mxu0
        %v883 = vadd.f32 %v368, %v882
        %v884 = vpop.f32.mrf.mxu0
        %v885 = vadd.f32 %v368, %v884
        %886 = vmatprep.mubr.f32.mxu0 0.0
        %887 = vmatmul.mubr.f32.gmra.mxu0 %v526
        %v888 = vpop.f32.mrf.mxu0
        %v889 = vadd.f32 %v373, %v888
        %v890 = vpop.f32.mrf.mxu0
        %v891 = vadd.f32 %v373, %v890
        %892 = vmatprep.mubr.f32.mxu0 0.0
        %893 = vmatmul.mubr.f32.gmra.mxu0 %v529
        %v894 = vpop.f32.mrf.mxu0
        %v895 = vadd.f32 %v378, %v894
        %v896 = vpop.f32.mrf.mxu0
        %v897 = vadd.f32 %v378, %v896
        %898 = vmatprep.mubr.f32.mxu0 0.0
        %899 = vmatmul.mubr.f32.gmra.mxu0 %v532
        %v900 = vpop.f32.mrf.mxu0
        %v901 = vadd.f32 %v383, %v900
        %v902 = vpop.f32.mrf.mxu0
        %v903 = vadd.f32 %v383, %v902
        %904 = vmatprep.mubr.f32.mxu0 0.0
        %905 = vmatmul.mubr.f32.gmra.mxu0 %v535
        %v906 = vpop.f32.mrf.mxu0
        %v907 = vadd.f32 %v388, %v906
        %v908 = vpop.f32.mrf.mxu0
        %v909 = vadd.f32 %v388, %v908
        %910 = vmatprep.mubr.f32.mxu0 0.0
        %911 = vmatmul.mubr.f32.gmra.mxu0 %v538
        %v912 = vpop.f32.mrf.mxu0
        %v913 = vadd.f32 %v393, %v912
        %v914 = vpop.f32.mrf.mxu0
        %v915 = vadd.f32 %v393, %v914
        %916 = vmatprep.mubr.f32.mxu0 0.0
        %917 = vmatmul.mubr.f32.gmra.mxu0 %v541
        %v918 = vpop.f32.mrf.mxu0
        %v919 = vadd.f32 %v398, %v918
        %v920 = vpop.f32.mrf.mxu0
        %v921 = vadd.f32 %v398, %v920
        %922 = vmatprep.mubr.f32.mxu0 0.0
        %923 = vmatmul.mubr.f32.gmra.mxu0 %v544
        %v924 = vpop.f32.mrf.mxu0
        %v925 = vadd.f32 %v403, %v924
        %v926 = vpop.f32.mrf.mxu0
        %v927 = vadd.f32 %v403, %v926
        %928 = vmatprep.mubr.f32.mxu0 0.0
        %929 = vmatmul.mubr.f32.gmra.mxu0 %v547
        %v930 = vpop.f32.mrf.mxu0
        %v931 = vadd.f32 %v408, %v930
        %v932 = vpop.f32.mrf.mxu0
        %v933 = vadd.f32 %v408, %v932
        %934 = vmatprep.mubr.f32.mxu0 0.0
        %935 = vmatmul.mubr.f32.gmra.mxu0 %v550
        %v936 = vpop.f32.mrf.mxu0
        %v937 = vadd.f32 %v413, %v936
        %v938 = vpop.f32.mrf.mxu0
        %v939 = vadd.f32 %v413, %v938
        %940 = vmatprep.mubr.f32.mxu0 0.0
        %941 = vmatmul.mubr.f32.gmra.mxu0 %v553
        %v942 = vpop.f32.mrf.mxu0
        %v943 = vadd.f32 %v418, %v942
        %v944 = vpop.f32.mrf.mxu0
        %v945 = vadd.f32 %v418, %v944
        %946 = vmatprep.mubr.f32.mxu0 0.0
        %947 = vmatmul.mubr.f32.gmra.mxu0 %v556
        %v948 = vpop.f32.mrf.mxu0
        %v949 = vadd.f32 %v423, %v948
        %v950 = vpop.f32.mrf.mxu0
        %v951 = vadd.f32 %v423, %v950
        %952 = vmatprep.mubr.f32.mxu0 0.0
        %953 = vmatmul.mubr.f32.gmra.mxu0 %v559
        %v954 = vpop.f32.mrf.mxu0
        %v955 = vadd.f32 %v428, %v954
        %v956 = vpop.f32.mrf.mxu0
        %v957 = vadd.f32 %v428, %v956
        %958 = vmatprep.mubr.f32.mxu0 0.0
        %959 = vmatmul.mubr.f32.gmra.mxu0 %v562
        %v960 = vpop.f32.mrf.mxu0
        %v961 = vadd.f32 %v433, %v960
        %v962 = vpop.f32.mrf.mxu0
        %v963 = vadd.f32 %v433, %v962
        %964 = vmatprep.mubr.f32.mxu0 0.0
        %965 = vmatmul.mubr.f32.gmra.mxu0 %v565
        %v966 = vpop.f32.mrf.mxu0
        %v967 = vadd.f32 %v438, %v966
        %v968 = vpop.f32.mrf.mxu0
        %v969 = vadd.f32 %v438, %v968
        %970 = vmatprep.mubr.f32.mxu0 0.0
        %971 = vmatmul.mubr.f32.gmra.mxu0 %v568
        %v972 = vpop.f32.mrf.mxu0
        %v973 = vadd.f32 %v443, %v972
        %v974 = vpop.f32.mrf.mxu0
        %v975 = vadd.f32 %v443, %v974
        %976 = vmatprep.mubr.f32.mxu0 0.0
        %977 = vmatmul.mubr.f32.gmra.mxu0 %v571
        %v978 = vpop.f32.mrf.mxu0
        %v979 = vadd.f32 %v448, %v978
        %v980 = vpop.f32.mrf.mxu0
        %v981 = vadd.f32 %v448, %v980
        %982 = vmatprep.mubr.f32.mxu0 0.0
        %983 = vmatmul.mubr.f32.gmra.mxu0 %v574
        %v984 = vpop.f32.mrf.mxu0
        %v985 = vadd.f32 %v453, %v984
        %v986 = vpop.f32.mrf.mxu0
        %v987 = vadd.f32 %v453, %v986
        %988 = vmatprep.mubr.f32.mxu0 0.0
        %989 = vmatmul.mubr.f32.gmra.mxu0 %v577
        %v990 = vpop.f32.mrf.mxu0
        %v991 = vadd.f32 %v458, %v990
        %v992 = vpop.f32.mrf.mxu0
        %v993 = vadd.f32 %v458, %v992
        %994 = vmatprep.mubr.f32.mxu0 0.0
        %995 = vmatmul.mubr.f32.gmra.mxu0 %v580
        %v996 = vpop.f32.mrf.mxu0
        %v997 = vadd.f32 %v463, %v996
        %v998 = vpop.f32.mrf.mxu0
        %v999 = vadd.f32 %v463, %v998
        %1000 = vmatprep.mubr.f32.mxu0 0.0
        %1001 = vmatmul.mubr.f32.gmra.mxu0 %v583
        %v1002 = vpop.f32.mrf.mxu0
        %v1003 = vadd.f32 %v468, %v1002
        %v1004 = vpop.f32.mrf.mxu0
        %v1005 = vadd.f32 %v468, %v1004
        %1006 = vmatprep.mubr.f32.mxu0 0.0
        %1007 = vmatmul.mubr.f32.gmra.mxu0 %v586
        %v1008 = vpop.f32.mrf.mxu0
        %v1009 = vadd.f32 %v473, %v1008
        %v1010 = vpop.f32.mrf.mxu0
        %v1011 = vadd.f32 %v473, %v1010
        %1012 = vmatprep.mubr.f32.mxu0 0.0
        %1013 = vmatmul.mubr.f32.gmra.mxu0 %v589
        %v1014 = vpop.f32.mrf.mxu0
        %v1015 = vadd.f32 %v478, %v1014
        %v1016 = vpop.f32.mrf.mxu0
        %v1017 = vadd.f32 %v478, %v1016
        %1018 = vmatprep.mubr.f32.mxu0 0.0
        %1019 = vmatmul.mubr.f32.gmra.mxu0 %v592
        %v1020 = vpop.f32.mrf.mxu0
        %v1021 = vadd.f32 %v483, %v1020
        %v1022 = vpop.f32.mrf.mxu0
        %v1023 = vadd.f32 %v483, %v1022
        %1024 = vmatprep.mubr.f32.mxu0 0.0
        %1025 = vmatmul.mubr.f32.gmra.mxu0 %v595
        %v1026 = vpop.f32.mrf.mxu0
        %v1027 = vadd.f32 %v488, %v1026
        %v1028 = vpop.f32.mrf.mxu0
        %v1029 = vadd.f32 %v488, %v1028
        %1030 = vmatprep.mubr.f32.mxu0 0.0
        %1031 = vmatmul.mubr.f32.gmra.mxu0 %v598
        %v1032 = vpop.f32.mrf.mxu0
        %v1033 = vadd.f32 %v493, %v1032
        %v1034 = vpop.f32.mrf.mxu0
        %v1035 = vadd.f32 %v493, %v1034
        %1036 = vmatprep.mubr.f32.mxu0 0.0
        %1037 = vmatmul.mubr.f32.gmra.mxu0 %v601
        %v1038 = vpop.f32.mrf.mxu0
        %v1039 = vadd.f32 %v498, %v1038
        %v1040 = vpop.f32.mrf.mxu0
        %v1041 = vadd.f32 %v498, %v1040
        %1042 = vmatprep.mubr.f32.mxu0 0.0
        %1043 = vmatmul.mubr.f32.gmra.mxu0 %v604
        %v1044 = vpop.f32.mrf.mxu0
        %v1045 = vadd.f32 %v503, %v1044
        %v1046 = vpop.f32.mrf.mxu0
        %v1047 = vadd.f32 %v503, %v1046
        %1048 = vmatprep.mubr.f32.mxu0 0.0
        %1049 = vmatmul.mubr.f32.gmra.mxu0 %v607
        %v1050 = vpop.f32.mrf.mxu0
        %v1051 = vadd.f32 %v508, %v1050
        %v1052 = vpop.f32.mrf.mxu0
        %v1053 = vadd.f32 %v508, %v1052
        %1054 = vmatprep.mubr.f32.mxu0 0.0
        %1055 = vmatmul.mubr.f32.gmra.mxu0 %v610
        %v1056 = vpop.f32.mrf.mxu0
        %v1057 = vadd.f32 %v513, %v1056
        %v1058 = vpop.f32.mrf.mxu0
        %v1059 = vadd.f32 %v513, %v1058
        %1060 = vdwg.mxu0
        %1061 = vmatprep.subr.mxu0 0.0
        %1062 = vmatpush1.xpose.msra.mxu0 %v754
        %1063 = vmatprep.subr.mxu0 0.0
        %1064 = vmatpush1.xpose.msra.mxu0 %v751
        %1065 = vmatprep.subr.mxu0 0.0
        %1066 = vmatpush1.xpose.msra.mxu0 %v748
        %1067 = vmatprep.subr.mxu0 0.0
        %1068 = vmatpush1.xpose.msra.mxu0 %v745
        %1069 = vmatprep.subr.mxu0 0.0
        %1070 = vmatpush1.xpose.msra.mxu0 %v742
        %1071 = vmatprep.subr.mxu0 0.0
        %1072 = vmatpush1.xpose.msra.mxu0 %v739
        %1073 = vmatprep.subr.mxu0 0.0
        %1074 = vmatpush1.xpose.msra.mxu0 %v736
        %1075 = vmatprep.subr.mxu0 0.0
        %1076 = vmatpush1.xpose.msra.mxu0 %v733
        %1077 = vmatprep.subr.mxu0 0.0
        %1078 = vmatpush1.xpose.msra.mxu0 %v730
        %1079 = vmatprep.subr.mxu0 0.0
        %1080 = vmatpush1.xpose.msra.mxu0 %v727
        %1081 = vmatprep.subr.mxu0 0.0
        %1082 = vmatpush1.xpose.msra.mxu0 %v724
        %1083 = vmatprep.subr.mxu0 0.0
        %1084 = vmatpush1.xpose.msra.mxu0 %v721
        %1085 = vmatprep.subr.mxu0 0.0
        %1086 = vmatpush1.xpose.msra.mxu0 %v718
        %1087 = vmatprep.subr.mxu0 0.0
        %1088 = vmatpush1.xpose.msra.mxu0 %v715
        %1089 = vmatprep.subr.mxu0 0.0
        %1090 = vmatpush1.xpose.msra.mxu0 %v712
        %1091 = vmatprep.subr.mxu0 0.0
        %1092 = vmatpush1.xpose.msra.mxu0 %v709
        %1093 = vmatprep.subr.mxu0 0.0
        %1094 = vmatpush2.xpose.msra.mxu0 %v802
        %1095 = vmatprep.subr.mxu0 0.0
        %1096 = vmatpush2.xpose.msra.mxu0 %v799
        %1097 = vmatprep.subr.mxu0 0.0
        %1098 = vmatpush2.xpose.msra.mxu0 %v796
        %1099 = vmatprep.subr.mxu0 0.0
        %1100 = vmatpush2.xpose.msra.mxu0 %v793
        %1101 = vmatprep.subr.mxu0 0.0
        %1102 = vmatpush2.xpose.msra.mxu0 %v790
        %1103 = vmatprep.subr.mxu0 0.0
        %1104 = vmatpush2.xpose.msra.mxu0 %v787
        %1105 = vmatprep.subr.mxu0 0.0
        %1106 = vmatpush2.xpose.msra.mxu0 %v784
        %1107 = vmatprep.subr.mxu0 0.0
        %1108 = vmatpush2.xpose.msra.mxu0 %v781
        %1109 = vmatprep.subr.mxu0 0.0
        %1110 = vmatpush2.xpose.msra.mxu0 %v778
        %1111 = vmatprep.subr.mxu0 0.0
        %1112 = vmatpush2.xpose.msra.mxu0 %v775
        %1113 = vmatprep.subr.mxu0 0.0
        %1114 = vmatpush2.xpose.msra.mxu0 %v772
        %1115 = vmatprep.subr.mxu0 0.0
        %1116 = vmatpush2.xpose.msra.mxu0 %v769
        %1117 = vmatprep.subr.mxu0 0.0
        %1118 = vmatpush2.xpose.msra.mxu0 %v766
        %1119 = vmatprep.subr.mxu0 0.0
        %1120 = vmatpush2.xpose.msra.mxu0 %v763
        %1121 = vmatprep.subr.mxu0 0.0
        %1122 = vmatpush2.xpose.msra.mxu0 %v760
        %1123 = vmatprep.subr.mxu0 0.0
        %1124 = vmatpush2.xpose.msra.mxu0 %v757
        %1125 = vmatprep.mubr.f32.mxu0 0.0
        %1126 = vmatmul.mubr.f32.gmra.mxu0 %v517
        %v1127 = vpop.f32.mrf.mxu0
        %v1128 = vadd.f32 %v358, %v1127
        %v1129 = vpop.f32.mrf.mxu0
        %v1130 = vadd.f32 %v358, %v1129
        %1131 = vmatprep.mubr.f32.mxu0 0.0
        %1132 = vmatmul.mubr.f32.gmra.mxu0 %v520
        %v1133 = vpop.f32.mrf.mxu0
        %v1134 = vadd.f32 %v363, %v1133
        %v1135 = vpop.f32.mrf.mxu0
        %v1136 = vadd.f32 %v363, %v1135
        %1137 = vmatprep.mubr.f32.mxu0 0.0
        %1138 = vmatmul.mubr.f32.gmra.mxu0 %v523
        %v1139 = vpop.f32.mrf.mxu0
        %v1140 = vadd.f32 %v368, %v1139
        %v1141 = vpop.f32.mrf.mxu0
        %v1142 = vadd.f32 %v368, %v1141
        %1143 = vmatprep.mubr.f32.mxu0 0.0
        %1144 = vmatmul.mubr.f32.gmra.mxu0 %v526
        %v1145 = vpop.f32.mrf.mxu0
        %v1146 = vadd.f32 %v373, %v1145
        %v1147 = vpop.f32.mrf.mxu0
        %v1148 = vadd.f32 %v373, %v1147
        %1149 = vmatprep.mubr.f32.mxu0 0.0
        %1150 = vmatmul.mubr.f32.gmra.mxu0 %v529
        %v1151 = vpop.f32.mrf.mxu0
        %v1152 = vadd.f32 %v378, %v1151
        %v1153 = vpop.f32.mrf.mxu0
        %v1154 = vadd.f32 %v378, %v1153
        %1155 = vmatprep.mubr.f32.mxu0 0.0
        %1156 = vmatmul.mubr.f32.gmra.mxu0 %v532
        %v1157 = vpop.f32.mrf.mxu0
        %v1158 = vadd.f32 %v383, %v1157
        %v1159 = vpop.f32.mrf.mxu0
        %v1160 = vadd.f32 %v383, %v1159
        %1161 = vmatprep.mubr.f32.mxu0 0.0
        %1162 = vmatmul.mubr.f32.gmra.mxu0 %v535
        %v1163 = vpop.f32.mrf.mxu0
        %v1164 = vadd.f32 %v388, %v1163
        %v1165 = vpop.f32.mrf.mxu0
        %v1166 = vadd.f32 %v388, %v1165
        %1167 = vmatprep.mubr.f32.mxu0 0.0
        %1168 = vmatmul.mubr.f32.gmra.mxu0 %v538
        %v1169 = vpop.f32.mrf.mxu0
        %v1170 = vadd.f32 %v393, %v1169
        %v1171 = vpop.f32.mrf.mxu0
        %v1172 = vadd.f32 %v393, %v1171
        %1173 = vmatprep.mubr.f32.mxu0 0.0
        %1174 = vmatmul.mubr.f32.gmra.mxu0 %v541
        %v1175 = vpop.f32.mrf.mxu0
        %v1176 = vadd.f32 %v398, %v1175
        %v1177 = vpop.f32.mrf.mxu0
        %v1178 = vadd.f32 %v398, %v1177
        %1179 = vmatprep.mubr.f32.mxu0 0.0
        %1180 = vmatmul.mubr.f32.gmra.mxu0 %v544
        %v1181 = vpop.f32.mrf.mxu0
        %v1182 = vadd.f32 %v403, %v1181
        %v1183 = vpop.f32.mrf.mxu0
        %v1184 = vadd.f32 %v403, %v1183
        %1185 = vmatprep.mubr.f32.mxu0 0.0
        %1186 = vmatmul.mubr.f32.gmra.mxu0 %v547
        %v1187 = vpop.f32.mrf.mxu0
        %v1188 = vadd.f32 %v408, %v1187
        %v1189 = vpop.f32.mrf.mxu0
        %v1190 = vadd.f32 %v408, %v1189
        %1191 = vmatprep.mubr.f32.mxu0 0.0
        %1192 = vmatmul.mubr.f32.gmra.mxu0 %v550
        %v1193 = vpop.f32.mrf.mxu0
        %v1194 = vadd.f32 %v413, %v1193
        %v1195 = vpop.f32.mrf.mxu0
        %v1196 = vadd.f32 %v413, %v1195
        %1197 = vmatprep.mubr.f32.mxu0 0.0
        %1198 = vmatmul.mubr.f32.gmra.mxu0 %v553
        %v1199 = vpop.f32.mrf.mxu0
        %v1200 = vadd.f32 %v418, %v1199
        %v1201 = vpop.f32.mrf.mxu0
        %v1202 = vadd.f32 %v418, %v1201
        %1203 = vmatprep.mubr.f32.mxu0 0.0
        %1204 = vmatmul.mubr.f32.gmra.mxu0 %v556
        %v1205 = vpop.f32.mrf.mxu0
        %v1206 = vadd.f32 %v423, %v1205
        %v1207 = vpop.f32.mrf.mxu0
        %v1208 = vadd.f32 %v423, %v1207
        %1209 = vmatprep.mubr.f32.mxu0 0.0
        %1210 = vmatmul.mubr.f32.gmra.mxu0 %v559
        %v1211 = vpop.f32.mrf.mxu0
        %v1212 = vadd.f32 %v428, %v1211
        %v1213 = vpop.f32.mrf.mxu0
        %v1214 = vadd.f32 %v428, %v1213
        %1215 = vmatprep.mubr.f32.mxu0 0.0
        %1216 = vmatmul.mubr.f32.gmra.mxu0 %v562
        %v1217 = vpop.f32.mrf.mxu0
        %v1218 = vadd.f32 %v433, %v1217
        %v1219 = vpop.f32.mrf.mxu0
        %v1220 = vadd.f32 %v433, %v1219
        %1221 = vmatprep.mubr.f32.mxu0 0.0
        %1222 = vmatmul.mubr.f32.gmra.mxu0 %v565
        %v1223 = vpop.f32.mrf.mxu0
        %v1224 = vadd.f32 %v438, %v1223
        %v1225 = vpop.f32.mrf.mxu0
        %v1226 = vadd.f32 %v438, %v1225
        %1227 = vmatprep.mubr.f32.mxu0 0.0
        %1228 = vmatmul.mubr.f32.gmra.mxu0 %v568
        %v1229 = vpop.f32.mrf.mxu0
        %v1230 = vadd.f32 %v443, %v1229
        %v1231 = vpop.f32.mrf.mxu0
        %v1232 = vadd.f32 %v443, %v1231
        %1233 = vmatprep.mubr.f32.mxu0 0.0
        %1234 = vmatmul.mubr.f32.gmra.mxu0 %v571
        %v1235 = vpop.f32.mrf.mxu0
        %v1236 = vadd.f32 %v448, %v1235
        %v1237 = vpop.f32.mrf.mxu0
        %v1238 = vadd.f32 %v448, %v1237
        %1239 = vmatprep.mubr.f32.mxu0 0.0
        %1240 = vmatmul.mubr.f32.gmra.mxu0 %v574
        %v1241 = vpop.f32.mrf.mxu0
        %v1242 = vadd.f32 %v453, %v1241
        %v1243 = vpop.f32.mrf.mxu0
        %v1244 = vadd.f32 %v453, %v1243
        %1245 = vmatprep.mubr.f32.mxu0 0.0
        %1246 = vmatmul.mubr.f32.gmra.mxu0 %v577
        %v1247 = vpop.f32.mrf.mxu0
        %v1248 = vadd.f32 %v458, %v1247
        %v1249 = vpop.f32.mrf.mxu0
        %v1250 = vadd.f32 %v458, %v1249
        %1251 = vmatprep.mubr.f32.mxu0 0.0
        %1252 = vmatmul.mubr.f32.gmra.mxu0 %v580
        %v1253 = vpop.f32.mrf.mxu0
        %v1254 = vadd.f32 %v463, %v1253
        %v1255 = vpop.f32.mrf.mxu0
        %v1256 = vadd.f32 %v463, %v1255
        %1257 = vmatprep.mubr.f32.mxu0 0.0
        %1258 = vmatmul.mubr.f32.gmra.mxu0 %v583
        %v1259 = vpop.f32.mrf.mxu0
        %v1260 = vadd.f32 %v468, %v1259
        %v1261 = vpop.f32.mrf.mxu0
        %v1262 = vadd.f32 %v468, %v1261
        %1263 = vmatprep.mubr.f32.mxu0 0.0
        %1264 = vmatmul.mubr.f32.gmra.mxu0 %v586
        %v1265 = vpop.f32.mrf.mxu0
        %v1266 = vadd.f32 %v473, %v1265
        %v1267 = vpop.f32.mrf.mxu0
        %v1268 = vadd.f32 %v473, %v1267
        %1269 = vmatprep.mubr.f32.mxu0 0.0
        %1270 = vmatmul.mubr.f32.gmra.mxu0 %v589
        %v1271 = vpop.f32.mrf.mxu0
        %v1272 = vadd.f32 %v478, %v1271
        %v1273 = vpop.f32.mrf.mxu0
        %v1274 = vadd.f32 %v478, %v1273
        %1275 = vmatprep.mubr.f32.mxu0 0.0
        %1276 = vmatmul.mubr.f32.gmra.mxu0 %v592
        %v1277 = vpop.f32.mrf.mxu0
        %v1278 = vadd.f32 %v483, %v1277
        %v1279 = vpop.f32.mrf.mxu0
        %v1280 = vadd.f32 %v483, %v1279
        %1281 = vmatprep.mubr.f32.mxu0 0.0
        %1282 = vmatmul.mubr.f32.gmra.mxu0 %v595
        %v1283 = vpop.f32.mrf.mxu0
        %v1284 = vadd.f32 %v488, %v1283
        %v1285 = vpop.f32.mrf.mxu0
        %v1286 = vadd.f32 %v488, %v1285
        %1287 = vmatprep.mubr.f32.mxu0 0.0
        %1288 = vmatmul.mubr.f32.gmra.mxu0 %v598
        %v1289 = vpop.f32.mrf.mxu0
        %v1290 = vadd.f32 %v493, %v1289
        %v1291 = vpop.f32.mrf.mxu0
        %v1292 = vadd.f32 %v493, %v1291
        %1293 = vmatprep.mubr.f32.mxu0 0.0
        %1294 = vmatmul.mubr.f32.gmra.mxu0 %v601
        %v1295 = vpop.f32.mrf.mxu0
        %v1296 = vadd.f32 %v498, %v1295
        %v1297 = vpop.f32.mrf.mxu0
        %v1298 = vadd.f32 %v498, %v1297
        %1299 = vmatprep.mubr.f32.mxu0 0.0
        %1300 = vmatmul.mubr.f32.gmra.mxu0 %v604
        %v1301 = vpop.f32.mrf.mxu0
        %v1302 = vadd.f32 %v503, %v1301
        %v1303 = vpop.f32.mrf.mxu0
        %v1304 = vadd.f32 %v503, %v1303
        %1305 = vmatprep.mubr.f32.mxu0 0.0
        %1306 = vmatmul.mubr.f32.gmra.mxu0 %v607
        %v1307 = vpop.f32.mrf.mxu0
        %v1308 = vadd.f32 %v508, %v1307
        %v1309 = vpop.f32.mrf.mxu0
        %v1310 = vadd.f32 %v508, %v1309
        %1311 = vmatprep.mubr.f32.mxu0 0.0
        %1312 = vmatmul.mubr.f32.gmra.mxu0 %v610
        %v1313 = vpop.f32.mrf.mxu0
        %v1314 = vadd.f32 %v513, %v1313
        %v1315 = vpop.f32.mrf.mxu0
        %v1316 = vadd.f32 %v513, %v1315
        %1317 = vdwg.mxu0
        %v1318 = vmax.f32 %v871, 0.0
        %v1319 = vmax.f32 %v873, 0.0
        %v1320 = vmax.f32 %v1128, 0.0
        %v1321 = vmax.f32 %v1130, 0.0
        %v1322 = vmax.f32 %v877, 0.0
        %v1323 = vmax.f32 %v879, 0.0
        %v1324 = vmax.f32 %v1134, 0.0
        %v1325 = vmax.f32 %v1136, 0.0
        %v1326 = vmax.f32 %v883, 0.0
        %v1327 = vmax.f32 %v885, 0.0
        %v1328 = vmax.f32 %v1140, 0.0
        %v1329 = vmax.f32 %v1142, 0.0
        %v1330 = vmax.f32 %v889, 0.0
        %v1331 = vmax.f32 %v891, 0.0
        %v1332 = vmax.f32 %v1146, 0.0
        %v1333 = vmax.f32 %v1148, 0.0
        %v1334 = vmax.f32 %v895, 0.0
        %v1335 = vmax.f32 %v897, 0.0
        %v1336 = vmax.f32 %v1152, 0.0
        %v1337 = vmax.f32 %v1154, 0.0
        %v1338 = vmax.f32 %v901, 0.0
        %v1339 = vmax.f32 %v903, 0.0
        %v1340 = vmax.f32 %v1158, 0.0
        %v1341 = vmax.f32 %v1160, 0.0
        %v1342 = vmax.f32 %v907, 0.0
        %v1343 = vmax.f32 %v909, 0.0
        %v1344 = vmax.f32 %v1164, 0.0
        %v1345 = vmax.f32 %v1166, 0.0
        %v1346 = vmax.f32 %v913, 0.0
        %v1347 = vmax.f32 %v915, 0.0
        %v1348 = vmax.f32 %v1170, 0.0
        %v1349 = vmax.f32 %v1172, 0.0
        %v1350 = vmax.f32 %v919, 0.0
        %v1351 = vmax.f32 %v921, 0.0
        %v1352 = vmax.f32 %v1176, 0.0
        %v1353 = vmax.f32 %v1178, 0.0
        %v1354 = vmax.f32 %v925, 0.0
        %v1355 = vmax.f32 %v927, 0.0
        %v1356 = vmax.f32 %v1182, 0.0
        %v1357 = vmax.f32 %v1184, 0.0
        %v1358 = vmax.f32 %v931, 0.0
        %v1359 = vmax.f32 %v933, 0.0
        %v1360 = vmax.f32 %v1188, 0.0
        %v1361 = vmax.f32 %v1190, 0.0
        %v1362 = vmax.f32 %v937, 0.0
        %v1363 = vmax.f32 %v939, 0.0
        %v1364 = vmax.f32 %v1194, 0.0
        %v1365 = vmax.f32 %v1196, 0.0
        %v1366 = vmax.f32 %v943, 0.0
        %v1367 = vmax.f32 %v945, 0.0
        %v1368 = vmax.f32 %v1200, 0.0
        %v1369 = vmax.f32 %v1202, 0.0
        %v1370 = vmax.f32 %v949, 0.0
        %v1371 = vmax.f32 %v951, 0.0
        %v1372 = vmax.f32 %v1206, 0.0
        %v1373 = vmax.f32 %v1208, 0.0
        %v1374 = vmax.f32 %v955, 0.0
        %v1375 = vmax.f32 %v957, 0.0
        %v1376 = vmax.f32 %v1212, 0.0
        %v1377 = vmax.f32 %v1214, 0.0
        %v1378 = vmax.f32 %v961, 0.0
        %v1379 = vmax.f32 %v963, 0.0
        %v1380 = vmax.f32 %v1218, 0.0
        %v1381 = vmax.f32 %v1220, 0.0
        %v1382 = vmax.f32 %v967, 0.0
        %v1383 = vmax.f32 %v969, 0.0
        %v1384 = vmax.f32 %v1224, 0.0
        %v1385 = vmax.f32 %v1226, 0.0
        %v1386 = vmax.f32 %v973, 0.0
        %v1387 = vmax.f32 %v975, 0.0
        %v1388 = vmax.f32 %v1230, 0.0
        %v1389 = vmax.f32 %v1232, 0.0
        %v1390 = vmax.f32 %v979, 0.0
        %v1391 = vmax.f32 %v981, 0.0
        %v1392 = vmax.f32 %v1236, 0.0
        %v1393 = vmax.f32 %v1238, 0.0
        %v1394 = vmax.f32 %v985, 0.0
        %v1395 = vmax.f32 %v987, 0.0
        %v1396 = vmax.f32 %v1242, 0.0
        %v1397 = vmax.f32 %v1244, 0.0
        %v1398 = vmax.f32 %v991, 0.0
        %v1399 = vmax.f32 %v993, 0.0
        %v1400 = vmax.f32 %v1248, 0.0
        %v1401 = vmax.f32 %v1250, 0.0
        %v1402 = vmax.f32 %v997, 0.0
        %v1403 = vmax.f32 %v999, 0.0
        %v1404 = vmax.f32 %v1254, 0.0
        %v1405 = vmax.f32 %v1256, 0.0
        %v1406 = vmax.f32 %v1003, 0.0
        %v1407 = vmax.f32 %v1005, 0.0
        %v1408 = vmax.f32 %v1260, 0.0
        %v1409 = vmax.f32 %v1262, 0.0
        %v1410 = vmax.f32 %v1009, 0.0
        %v1411 = vmax.f32 %v1011, 0.0
        %v1412 = vmax.f32 %v1266, 0.0
        %v1413 = vmax.f32 %v1268, 0.0
        %v1414 = vmax.f32 %v1015, 0.0
        %v1415 = vmax.f32 %v1017, 0.0
        %v1416 = vmax.f32 %v1272, 0.0
        %v1417 = vmax.f32 %v1274, 0.0
        %v1418 = vmax.f32 %v1021, 0.0
        %v1419 = vmax.f32 %v1023, 0.0
        %v1420 = vmax.f32 %v1278, 0.0
        %v1421 = vmax.f32 %v1280, 0.0
        %v1422 = vmax.f32 %v1027, 0.0
        %v1423 = vmax.f32 %v1029, 0.0
        %v1424 = vmax.f32 %v1284, 0.0
        %v1425 = vmax.f32 %v1286, 0.0
        %v1426 = vmax.f32 %v1033, 0.0
        %v1427 = vmax.f32 %v1035, 0.0
        %v1428 = vmax.f32 %v1290, 0.0
        %v1429 = vmax.f32 %v1292, 0.0
        %v1430 = vmax.f32 %v1039, 0.0
        %v1431 = vmax.f32 %v1041, 0.0
        %v1432 = vmax.f32 %v1296, 0.0
        %v1433 = vmax.f32 %v1298, 0.0
        %v1434 = vmax.f32 %v1045, 0.0
        %v1435 = vmax.f32 %v1047, 0.0
        %v1436 = vmax.f32 %v1302, 0.0
        %v1437 = vmax.f32 %v1304, 0.0
        %v1438 = vmax.f32 %v1051, 0.0
        %v1439 = vmax.f32 %v1053, 0.0
        %v1440 = vmax.f32 %v1308, 0.0
        %v1441 = vmax.f32 %v1310, 0.0
        %v1442 = vmax.f32 %v1057, 0.0
        %v1443 = vmax.f32 %v1059, 0.0
        %v1444 = vmax.f32 %v1314, 0.0
        %v1445 = vmax.f32 %v1316, 0.0
        %v1446 = vld [vmem:[%s3] sm:$0x3]
        %s1447 = sld [smem:[#allocation2]]
        %v1448 = vstv %s1447
        %v1450 = vlaneseq
        %v1451 = vshrl.u32 %v1450, 7
        %v1452 = vsub.s32 0, %v1451
        %v1453 = vrot.slane %v1446, %v1452
        %v1454 = vlaneseq
        %v1455 = vshrl.u32 %v1454, 7
        %v1456 = vsub.s32 1, %v1455
        %v1457 = vrot.slane %v1446, %v1456
        %1460 = vmatprep.subr.mxu0 %v1379
        %1461 = vmatpush1.msra.mxu0 %v1378
        %1462 = vmatprep.subr.mxu0 %v1375
        %1463 = vmatpush1.msra.mxu0 %v1374
        %1464 = vmatprep.subr.mxu0 %v1371
        %1465 = vmatpush1.msra.mxu0 %v1370
        %1466 = vmatprep.subr.mxu0 %v1367
        %1467 = vmatpush1.msra.mxu0 %v1366
        %1468 = vmatprep.subr.mxu0 %v1363
        %1469 = vmatpush1.msra.mxu0 %v1362
        %1470 = vmatprep.subr.mxu0 %v1359
        %1471 = vmatpush1.msra.mxu0 %v1358
        %1472 = vmatprep.subr.mxu0 %v1355
        %1473 = vmatpush1.msra.mxu0 %v1354
        %1474 = vmatprep.subr.mxu0 %v1351
        %1475 = vmatpush1.msra.mxu0 %v1350
        %1476 = vmatprep.subr.mxu0 %v1347
        %1477 = vmatpush1.msra.mxu0 %v1346
        %1478 = vmatprep.subr.mxu0 %v1343
        %1479 = vmatpush1.msra.mxu0 %v1342
        %1480 = vmatprep.subr.mxu0 %v1339
        %1481 = vmatpush1.msra.mxu0 %v1338
        %1482 = vmatprep.subr.mxu0 %v1335
        %1483 = vmatpush1.msra.mxu0 %v1334
        %1484 = vmatprep.subr.mxu0 %v1331
        %1485 = vmatpush1.msra.mxu0 %v1330
        %1486 = vmatprep.subr.mxu0 %v1327
        %1487 = vmatpush1.msra.mxu0 %v1326
        %1488 = vmatprep.subr.mxu0 %v1323
        %1489 = vmatpush1.msra.mxu0 %v1322
        %1490 = vmatprep.subr.mxu0 %v1319
        %1491 = vmatpush1.msra.mxu0 %v1318
        %1492 = vmatprep.subr.mxu0 %v1443
        %1493 = vmatpush2.msra.mxu0 %v1442
        %1494 = vmatprep.subr.mxu0 %v1439
        %1495 = vmatpush2.msra.mxu0 %v1438
        %1496 = vmatprep.subr.mxu0 %v1435
        %1497 = vmatpush2.msra.mxu0 %v1434
        %1498 = vmatprep.subr.mxu0 %v1431
        %1499 = vmatpush2.msra.mxu0 %v1430
        %1500 = vmatprep.subr.mxu0 %v1427
        %1501 = vmatpush2.msra.mxu0 %v1426
        %1502 = vmatprep.subr.mxu0 %v1423
        %1503 = vmatpush2.msra.mxu0 %v1422
        %1504 = vmatprep.subr.mxu0 %v1419
        %1505 = vmatpush2.msra.mxu0 %v1418
        %1506 = vmatprep.subr.mxu0 %v1415
        %1507 = vmatpush2.msra.mxu0 %v1414
        %1508 = vmatprep.subr.mxu0 %v1411
        %1509 = vmatpush2.msra.mxu0 %v1410
        %1510 = vmatprep.subr.mxu0 %v1407
        %1511 = vmatpush2.msra.mxu0 %v1406
        %1512 = vmatprep.subr.mxu0 %v1403
        %1513 = vmatpush2.msra.mxu0 %v1402
        %1514 = vmatprep.subr.mxu0 %v1399
        %1515 = vmatpush2.msra.mxu0 %v1398
        %1516 = vmatprep.subr.mxu0 %v1395
        %1517 = vmatpush2.msra.mxu0 %v1394
        %1518 = vmatprep.subr.mxu0 %v1391
        %1519 = vmatpush2.msra.mxu0 %v1390
        %1520 = vmatprep.subr.mxu0 %v1387
        %1521 = vmatpush2.msra.mxu0 %v1386
        %1522 = vmatprep.subr.mxu0 %v1383
        %1523 = vmatpush2.msra.mxu0 %v1382
        %1524 = vmatprep.mubr.f32.mxu0 %v1457
        %1525 = vmatmul.mubr.f32.gmra.mxu0 %v1453
        %v1526 = vpop.f32.mrf.mxu0
        %v1527 = vadd.f32 %v1448, %v1526
        %v1528 = vpop.f32.mrf.mxu0
        %v1529 = vadd.f32 %v1448, %v1528
        %1530 = vdwg.mxu0
        %1531 = vmatprep.subr.mxu0 %v1381
        %1532 = vmatpush1.msra.mxu0 %v1380
        %1533 = vmatprep.subr.mxu0 %v1377
        %1534 = vmatpush1.msra.mxu0 %v1376
        %1535 = vmatprep.subr.mxu0 %v1373
        %1536 = vmatpush1.msra.mxu0 %v1372
        %1537 = vmatprep.subr.mxu0 %v1369
        %1538 = vmatpush1.msra.mxu0 %v1368
        %1539 = vmatprep.subr.mxu0 %v1365
        %1540 = vmatpush1.msra.mxu0 %v1364
        %1541 = vmatprep.subr.mxu0 %v1361
        %1542 = vmatpush1.msra.mxu0 %v1360
        %1543 = vmatprep.subr.mxu0 %v1357
        %1544 = vmatpush1.msra.mxu0 %v1356
        %1545 = vmatprep.subr.mxu0 %v1353
        %1546 = vmatpush1.msra.mxu0 %v1352
        %1547 = vmatprep.subr.mxu0 %v1349
        %1548 = vmatpush1.msra.mxu0 %v1348
        %1549 = vmatprep.subr.mxu0 %v1345
        %1550 = vmatpush1.msra.mxu0 %v1344
        %1551 = vmatprep.subr.mxu0 %v1341
        %1552 = vmatpush1.msra.mxu0 %v1340
        %1553 = vmatprep.subr.mxu0 %v1337
        %1554 = vmatpush1.msra.mxu0 %v1336
        %1555 = vmatprep.subr.mxu0 %v1333
        %1556 = vmatpush1.msra.mxu0 %v1332
        %1557 = vmatprep.subr.mxu0 %v1329
        %1558 = vmatpush1.msra.mxu0 %v1328
        %1559 = vmatprep.subr.mxu0 %v1325
        %1560 = vmatpush1.msra.mxu0 %v1324
        %1561 = vmatprep.subr.mxu0 %v1321
        %1562 = vmatpush1.msra.mxu0 %v1320
        %1563 = vmatprep.subr.mxu0 %v1445
        %1564 = vmatpush2.msra.mxu0 %v1444
        %1565 = vmatprep.subr.mxu0 %v1441
        %1566 = vmatpush2.msra.mxu0 %v1440
        %1567 = vmatprep.subr.mxu0 %v1437
        %1568 = vmatpush2.msra.mxu0 %v1436
        %1569 = vmatprep.subr.mxu0 %v1433
        %1570 = vmatpush2.msra.mxu0 %v1432
        %1571 = vmatprep.subr.mxu0 %v1429
        %1572 = vmatpush2.msra.mxu0 %v1428
        %1573 = vmatprep.subr.mxu0 %v1425
        %1574 = vmatpush2.msra.mxu0 %v1424
        %1575 = vmatprep.subr.mxu0 %v1421
        %1576 = vmatpush2.msra.mxu0 %v1420
        %1577 = vmatprep.subr.mxu0 %v1417
        %1578 = vmatpush2.msra.mxu0 %v1416
        %1579 = vmatprep.subr.mxu0 %v1413
        %1580 = vmatpush2.msra.mxu0 %v1412
        %1581 = vmatprep.subr.mxu0 %v1409
        %1582 = vmatpush2.msra.mxu0 %v1408
        %1583 = vmatprep.subr.mxu0 %v1405
        %1584 = vmatpush2.msra.mxu0 %v1404
        %1585 = vmatprep.subr.mxu0 %v1401
        %1586 = vmatpush2.msra.mxu0 %v1400
        %1587 = vmatprep.subr.mxu0 %v1397
        %1588 = vmatpush2.msra.mxu0 %v1396
        %1589 = vmatprep.subr.mxu0 %v1393
        %1590 = vmatpush2.msra.mxu0 %v1392
        %1591 = vmatprep.subr.mxu0 %v1389
        %1592 = vmatpush2.msra.mxu0 %v1388
        %1593 = vmatprep.subr.mxu0 %v1385
        %1594 = vmatpush2.msra.mxu0 %v1384
        %1595 = vmatprep.mubr.f32.mxu0 %v1457
        %1596 = vmatmul.mubr.f32.gmra.mxu0 %v1453
        %v1597 = vpop.f32.mrf.mxu0
        %v1598 = vadd.f32 %v1448, %v1597
        %v1599 = vpop.f32.mrf.mxu0
        %v1600 = vadd.f32 %v1448, %v1599
        %1601 = vdwg.mxu0
        %v1606 = vcombine.low %v1527, %v1529
        %v1607 = vcombine.low %v1598, %v1600
        %v1609 = vunpack.c.l.s4 1966171168
        %v1610 = vunpack.c.0.s8 %v1609
        %v1611 = vlaneseq
        %v1612 = vshrl.u32 %v1611, 7
        %v1613 = vsub.s32 %v1610, %v1612
        %v1614 = vrot.slane %v1606, %v1613
        %v1616 = vunpack.c.l.s4 1966171168
        %v1617 = vunpack.c.0.s8 %v1616
        %v1618 = vlaneseq
        %v1619 = vshrl.u32 %v1618, 7
        %v1620 = vsub.s32 %v1617, %v1619
        %v1621 = vrot.slane %v1607, %v1620
        %v1622 = vcombine.low %v1614, %v1621
        %v1624 = vunpack.c.l.s4 1966171168
        %v1625 = vunpack.c.0.s8 %v1624
        %v1626 = vlaneseq
        %v1627 = vshrl.u32 %v1626, 7
        %v1628 = vsub.s32 %v1625, %v1627
        %v1629 = vrot.slane %v1622, %v1628
        %v1631 = vlaneseq
        %vm1632 = vcmp.ge.s32.totalorder %v1631, 0
        %vm1633 = vcmp.lt.s32.totalorder %v1631, 512
        %vm1634 = vmand %vm1632, %vm1633
        %1635 = vst.msk [vmem:[%s219] sm:$0xf] %vm1634, %v1629
        %s1636 = sand.u32 %s138, 1
        %s1637 = scalar_lea.sflag [#allocation4], %s1636
        %s1638 = sand.u32 %s138, 1
        %s1639 = smul.addr %s1638, 4
        %s1640 = scalar_lea.vmem [#allocation3], %s1639
        // Predicated region
        $region41: #{tpu_custom_call.1} parent=39 // pred_check
          %p1641 = pneg %p148
        $region42: #{tpu_custom_call.1} parent=39 // pred_check_branch
          %1643 = sbr.rel (%p1641) target = $region44
        $region43: #{tpu_custom_call.1} parent=39 // pred_region
          %s1644 = smul.u32 4, %s20
          %s1646 = ssub.s32 64, 64
          %1647 = vsyncadd %s1637, %s1646
          %s1648 = smul.addr %s1644, 16
          %s1649 = scalar_lea.hbm %s5, %s1648
          %s1651 = sshll.u32 %s1640, 4
          %s1652 = int_to_ptr.vmem [resolvable:$true] %s1651
          %1654 = dma.vmem_to_hbm [thread:$0]  %s1652, 64, %s1649, %s1637
        $region44: #{tpu_custom_call.1} parent=39 // pred_fallthru
          _
      $region40: #{tpu_custom_call.1} parent=5 // pred_fallthru
        _
      %p1655 = scmp.le.s32.totalorder 2, %s15
      // Predicated region
      $region45: #{tpu_custom_call.1} parent=5 // pred_check
        %p1656 = pneg %p1655
      $region46: #{tpu_custom_call.1} parent=5 // pred_check_branch
        %1658 = sbr.rel (%p1656) target = $region48
      $region47: #{tpu_custom_call.1} parent=5 // pred_region
        %s1659 = ssub.s32 %s15, 2
        // Predicated region
        $region49: #{tpu_custom_call.1} parent=47 // pred_check
          %p1660 = pneg %p154
        $region50: #{tpu_custom_call.1} parent=47 // pred_check_branch
          %1662 = sbr.rel (%p1660) target = $region52
        $region51: #{tpu_custom_call.1} parent=47 // pred_region
          %s1663 = sand.u32 %s139, 1
          %s1664 = scalar_lea.sflag [#allocation4], %s1663
          %s1665 = sand.u32 %s139, 1
          %s1666 = smul.addr %s1665, 4
          %s1667 = scalar_lea.vmem [#allocation3], %s1666
          %1668 = dma.done %s1664, 64
        $region52: #{tpu_custom_call.1} parent=47 // pred_fallthru
          _
      $region48: #{tpu_custom_call.1} parent=5 // pred_fallthru
        _
    $region6: #{tpu_custom_call.1} parent=1 // loop_footer
      %s19 = sadd.s32 1, %s15
    $region7: #{tpu_custom_call.1} parent=1 // loop_footer_branch
      %14 = sbr.rel target = $region3
    $region8: #{tpu_custom_call.1} parent=1 // loop_exit
      _
    %1669 = vsyncpa [#allocation4], 1
    %s1670 = scalar_lea.sflag [#allocation4], 1
    %1671 = vsyncpa %s1670, 1

</llo_original>
